<compile_context>
chip_gen: v7x
topology: tpu7x:2x2x1
jax: 0.10.0
libtpu: 0.0.40
codegen_flags: <defaults>
</compile_context>

<pallas_src>
import jax
import jax.numpy as jnp
import numpy as np
from jax.experimental import pallas as pl
from jax.experimental.pallas import tpu as pltpu

HIDDEN = 32


# --------------------------------------------------------------------------------------
# Kernels
# --------------------------------------------------------------------------------------
def _graph_mean_kernel(pool_ref, f_ref, cntinv_ref, wg_ref, bg_ref, u_ref, acc_ref):
    """Per-graph feature sums accumulated over node tiles; finalize the global-GCN output.

    Grid: (num_tiles,) over the node axis ("arbitrary" -> accumulator pattern).
    pool_ref [B, tn]  f_ref [tn, F]  cntinv_ref [B, 1]  wg_ref [F, d]  bg_ref [1, d]
    u_ref [B, d] f32 (out, written on the last step)   acc_ref [B, F] f32 scratch
    """
    i = pl.program_id(0)

    @pl.when(i == 0)
    def _():
        acc_ref[...] = jnp.zeros_like(acc_ref)

    acc_ref[...] += jnp.dot(pool_ref[...], f_ref[...], preferred_element_type=jnp.float32)

    @pl.when(i == pl.num_programs(0) - 1)
    def _():
        mean = acc_ref[...] * cntinv_ref[...]                         # per-graph mean(f)
        u_ref[...] = jnp.maximum(
            jnp.dot(mean, wg_ref[...], preferred_element_type=jnp.float32) + bg_ref[...],
            0.0)


def _node_prep_kernel(f_ref, dinv_ref, poolT_ref, u_ref, wl_ref, z_ref, x2_ref):
    """Row-tiled per-node pre-aggregation (cheap, O(N*d)).

    z  = D^-1/2 * (f @ W_loc)           -> bf16, fed to the big A @ z matmul
    x2 = poolT @ u                      -> relu'd global-conv output broadcast per node
    """
    f32 = jnp.float32
    z = dinv_ref[...] * jnp.dot(f_ref[...], wl_ref[...], preferred_element_type=f32)
    z_ref[...] = z.astype(z_ref.dtype)
    x2_ref[...] = jnp.dot(poolT_ref[...], u_ref[...], preferred_element_type=f32)


def _gcn_layer_kernel(a_ref, z_ref, dinv_ref, x2_ref, w_ref, b_ref, h_ref):
    """One row-tile of a full two-aggregator layer (dominant O(N^2*d) work).

    a_ref  [tm, Np] int8 (A_loc + I, 0/1; cast to bf16 on the VPU right before the MXU)
    z_ref  [Np, d] bf16 (resident)        dinv_ref [tm, 1] f32
    x2_ref [tm, d] f32 (global-conv output already relu'd and broadcast per node)
    w_ref  [3d, d] f32: rows 0:d  = M1 half acting on x1,
                        rows d:2d = M1 half acting on x2, rows 2d:3d = M2
    b_ref  [3, 1, d] f32 (b_loc, mlp_b1, mlp_b2)
    h_ref  [tm, d] f32 (out)
    """
    f32 = jnp.float32
    d = h_ref.shape[-1]
    # int8 -> bf16 cast (exact for 0/1) feeds the bf16 MXU with f32 accumulation.
    a_bf16 = a_ref[...].astype(jnp.bfloat16)
    agg = jnp.dot(a_bf16, z_ref[...], preferred_element_type=f32)               # [tm, d]
    x1 = jnp.maximum(dinv_ref[...] * agg + b_ref[0], 0.0)                       # relu(conv_loc)
    x2 = x2_ref[...]                                                            # relu(conv_glob)
    # mlp: Linear(2d, d) split into two dots (no lane-dim concat / relayout), ReLU, Linear(d, d).
    t = jnp.maximum(
        jnp.dot(x1, w_ref[0:d, :], preferred_element_type=f32)
        + jnp.dot(x2, w_ref[d:2 * d, :], preferred_element_type=f32)
        + b_ref[1], 0.0)
    h_ref[...] = jnp.dot(t, w_ref[2 * d:3 * d, :], preferred_element_type=f32) + b_ref[2]


def _pool_lin_kernel(pool_ref, h_ref, w_ref, b_ref, out_ref, acc_ref):
    """global_add_pool + final Linear(d, 1), accumulated over node tiles."""
    i = pl.program_id(0)

    @pl.when(i == 0)
    def _():
        acc_ref[...] = jnp.zeros_like(acc_ref)

    acc_ref[...] += jnp.dot(pool_ref[...], h_ref[...], preferred_element_type=jnp.float32)

    @pl.when(i == pl.num_programs(0) - 1)
    def _():
        out_ref[...] = jnp.dot(acc_ref[...], w_ref[...],
                               preferred_element_type=jnp.float32) + b_ref[...]


# --------------------------------------------------------------------------------------
# Wrapper
# --------------------------------------------------------------------------------------
def _vmem_budgets():
    """Generation-aware VMEM request & A-slab budget (v5e/v6e: 128 MiB, v7x: 64 MiB/core)."""
    cap = 64 * 1024 * 1024                       # conservative fallback (v7x per-core)
    try:
        info = pltpu.get_tpu_info()
        cap = int(getattr(info, "vmem_capacity_bytes", cap))
    except Exception:
        pass
    vmem_limit = int(cap * 0.8)                  # headroom for Mosaic internal scratch
    slab_budget = cap // 4                       # double-buffered int8 A row-slab budget
    return vmem_limit, slab_budget


def _choose_tiling(n, slab_budget_bytes):
    """Pick (tile_rows, padded_N): prefer large 128-aligned row tiles; pad N up to a multiple.

    On v7x, even tile counts >= 8 split best across the 2 TensorCores; not enforced here.
    """
    n128 = max(128, pl.cdiv(n, 128) * 128)
    for tm in (1024, 512, 256, 128):
        if tm > n128:
            continue
        n_pad = pl.cdiv(n128, tm) * tm
        if 2 * tm * n_pad <= slab_budget_bytes:   # int8 slab, double-buffered
            return tm, n_pad
    # TODO(synk): at this point add a contraction ("arbitrary") grid axis over A/z rather
    #             than running with slabs that exceed the budget.
    return 128, pl.cdiv(n128, 128) * 128


def gcn_two_aggregators_forward(x, a_loc_01, pool, params):
    """Full forward pass.

    x         [N, C]  f32  node features
    a_loc_01  [N, N]  0/1  local adjacency WITH self loops (A + I)
    pool      [B, N]  0/1  one-hot graph membership (global_add_pool matrix); the fully
                           connected "global" graph is handled via the per-graph mean.
    Returns   [B]     f32
    """
    f32 = jnp.float32
    N = x.shape[0]
    B = pool.shape[0]
    d = params["m1_w2"].shape[0]

    vmem_limit, slab_budget = _vmem_budgets()
    tm, n_pad = _choose_tiling(N, slab_budget)
    num_tiles = n_pad // tm
    cp_parallel = pltpu.CompilerParams(dimension_semantics=("parallel",),
                                       vmem_limit_bytes=vmem_limit)
    cp_reduce = pltpu.CompilerParams(dimension_semantics=("arbitrary",),
                                     vmem_limit_bytes=vmem_limit)

    # ---- pad node axis to a tile multiple (pad rows/cols are zero -> fully isolated) ----
    pad_n = n_pad - N
    a01 = a_loc_01
    pool = pool.astype(f32)
    if pad_n:
        a01 = jnp.pad(a01, ((0, pad_n), (0, pad_n)))
        x = jnp.pad(x, ((0, pad_n), (0, 0)))
        pool = jnp.pad(pool, ((0, 0), (0, pad_n)))
    poolT = pool.T                                                    # [Np, B]
    a_i8 = a01.astype(jnp.int8)                                       # 0/1: exact, half of bf16 bytes
    deg = jnp.sum(a01.astype(f32), axis=1, keepdims=True)             # [Np, 1]
    dinv = 1.0 / jnp.sqrt(jnp.maximum(deg, 1.0))
    counts = jnp.sum(pool, axis=1, keepdims=True)                     # [B, 1]
    cnt_inv = 1.0 / jnp.maximum(counts, 1.0)

    def prep(f, w_loc, w_glob, b_glob):
        F = f.shape[1]
        # (a) per-graph mean -> global-conv output u  (accumulated over node tiles)
        u = pl.pallas_call(
            _graph_mean_kernel,
            out_shape=jax.ShapeDtypeStruct((B, d), f32),
            grid=(num_tiles,),
            in_specs=[
                pl.BlockSpec((B, tm), lambda i: (0, i)),              # pool column slab
                pl.BlockSpec((tm, F), lambda i: (i, 0)),              # node features
                pl.BlockSpec((B, 1), lambda i: (0, 0)),
                pl.BlockSpec((F, d), lambda i: (0, 0)),
                pl.BlockSpec((1, d), lambda i: (0, 0)),
            ],
            out_specs=pl.BlockSpec((B, d), lambda i: (0, 0)),
            scratch_shapes=[pltpu.VMEM((B, F), f32)],
            compiler_params=cp_reduce,
        )(pool, f, cnt_inv, w_glob, b_glob)
        # (b) per-node: z = dinv * f @ W_loc (bf16), x2 = per-node broadcast of u
        z, x2 = pl.pallas_call(
            _node_prep_kernel,
            out_shape=(jax.ShapeDtypeStruct((n_pad, d), jnp.bfloat16),
                       jax.ShapeDtypeStruct((n_pad, d), f32)),
            grid=(num_tiles,),
            in_specs=[
                pl.BlockSpec((tm, F), lambda i: (i, 0)),
                pl.BlockSpec((tm, 1), lambda i: (i, 0)),
                pl.BlockSpec((tm, B), lambda i: (i, 0)),
                pl.BlockSpec((B, d), lambda i: (0, 0)),
                pl.BlockSpec((F, d), lambda i: (0, 0)),
            ],
            out_specs=(pl.BlockSpec((tm, d), lambda i: (i, 0)),
                       pl.BlockSpec((tm, d), lambda i: (i, 0))),
            compiler_params=cp_parallel,
        )(f, dinv, poolT, u, w_loc)
        return z, x2

    def layer(z, x2, b_loc, m_w1, m_b1, m_w2, m_b2):
        wstack = jnp.concatenate([m_w1, m_w2], axis=0)                # [3d, d]
        bstack = jnp.stack([b_loc, m_b1, m_b2], axis=0)               # [3, 1, d]
        return pl.pallas_call(
            _gcn_layer_kernel,
            out_shape=jax.ShapeDtypeStruct((n_pad, d), f32),
            grid=(num_tiles,),
            in_specs=[
                pl.BlockSpec((tm, n_pad), lambda i: (i, 0)),          # int8 A row slab (dominant stream)
                pl.BlockSpec((n_pad, d), lambda i: (0, 0)),           # z, resident
                pl.BlockSpec((tm, 1), lambda i: (i, 0)),              # dinv rows
                pl.BlockSpec((tm, d), lambda i: (i, 0)),              # x2 rows (global conv broadcast)
                pl.BlockSpec((3 * d, d), lambda i: (0, 0)),           # stacked MLP weights
                pl.BlockSpec((3, 1, d), lambda i: (0, 0, 0)),         # stacked biases
            ],
            out_specs=pl.BlockSpec((tm, d), lambda i: (i, 0)),
            compiler_params=cp_parallel,
        )(a_i8, z, dinv, x2, wstack, bstack)

    # ---- layer 1 ----
    z1, x2_1 = prep(x, params["w11"], params["w12"], params["b12"])
    h1 = layer(z1, x2_1, params["b11"],
               params["m1_w1"], params["m1_b1"], params["m1_w2"], params["m1_b2"])
    # ---- layer 2 ----
    z2, x2_2 = prep(h1, params["w21"], params["w22"], params["b22"])
    h2 = layer(z2, x2_2, params["b21"],
               params["m2_w1"], params["m2_b1"], params["m2_w2"], params["m2_b2"])
    # ---- global_add_pool + Linear(d, 1), accumulated over node tiles ----
    out = pl.pallas_call(
        _pool_lin_kernel,
        out_shape=jax.ShapeDtypeStruct((B, 1), f32),
        grid=(num_tiles,),
        in_specs=[
            pl.BlockSpec((B, tm), lambda i: (0, i)),
            pl.BlockSpec((tm, d), lambda i: (i, 0)),
            pl.BlockSpec((d, 1), lambda i: (0, 0)),
            pl.BlockSpec((1, 1), lambda i: (0, 0)),
        ],
        out_specs=pl.BlockSpec((B, 1), lambda i: (0, 0)),
        scratch_shapes=[pltpu.VMEM((B, d), f32)],
        compiler_params=cp_reduce,
    )(pool, h2, params["lin_w"], params["lin_b"])
    return out[:, 0]                                                  # x.squeeze(dim=-1)


# --------------------------------------------------------------------------------------
# Pure-JAX reference (true GCN math with dense normalized matrices)
# --------------------------------------------------------------------------------------
def _reference_forward(x, a_loc_01, pool, params):
    f32 = jnp.float32
    a = a_loc_01.astype(f32)
    deg = a.sum(axis=1, keepdims=True)
    dinv = 1.0 / jnp.sqrt(jnp.maximum(deg, 1.0))
    A_loc = dinv * a * dinv.T                                         # D^-1/2 (A+I) D^-1/2
    counts = pool.sum(axis=1, keepdims=True)
    A_glob = pool.T @ (pool / counts)                                 # normalized fully-connected graph

    relu = lambda v: jnp.maximum(v, 0.0)
    gcn = lambda f, A, W, b: A @ (f @ W) + b

    x1 = relu(gcn(x, A_loc, params["w11"], params["b11"]))
    x2 = relu(gcn(x, A_glob, params["w12"], params["b12"]))
    h = relu(jnp.concatenate([x1, x2], -1) @ params["m1_w1"] + params["m1_b1"]) @ params["m1_w2"] + params["m1_b2"]
    x1 = relu(gcn(h, A_loc, params["w21"], params["b21"]))
    x2 = relu(gcn(h, A_glob, params["w22"], params["b22"]))
    h = relu(jnp.concatenate([x1, x2], -1) @ params["m2_w1"] + params["m2_b1"]) @ params["m2_w2"] + params["m2_b2"]
    g = pool @ h
    return (g @ params["lin_w"] + params["lin_b"])[:, 0]


def init_params(key, in_channels, dim=HIDDEN):
    keys = iter(jax.random.split(key, 40))

    def lin(fan_in, fan_out):
        bound = 1.0 / np.sqrt(fan_in)
        w = jax.random.uniform(next(keys), (fan_in, fan_out), jnp.float32, -bound, bound)
        b = jax.random.uniform(next(keys), (1, fan_out), jnp.float32, -bound, bound)
        return w, b

    p = {}
    p["w11"], p["b11"] = lin(in_channels, dim)        # conv_1_1 (local)
    p["w12"], p["b12"] = lin(in_channels, dim)        # conv_1_2 (global)
    p["m1_w1"], p["m1_b1"] = lin(2 * dim, dim)        # mlp_1: Linear(2d, d)
    p["m1_w2"], p["m1_b2"] = lin(dim, dim)            # mlp_1: Linear(d, d)
    p["w21"], p["b21"] = lin(dim, dim)                # conv_2_1 (local)
    p["w22"], p["b22"] = lin(dim, dim)                # conv_2_2 (global)
    p["m2_w1"], p["m2_b1"] = lin(2 * dim, dim)        # mlp_2
    p["m2_w2"], p["m2_b2"] = lin(dim, dim)
    p["lin_w"], p["lin_b"] = lin(dim, 1)              # final Linear(d, 1): [d,1], [1,1]
    return p


if __name__ == "__main__":
    key = jax.random.PRNGKey(0)
    B_GRAPHS = 2          # graphs in the batch
    NODES = 32            # nodes per graph
    N = B_GRAPHS * NODES
    C = 4                 # input node-feature channels
    dim = HIDDEN

    k_x, k_p = jax.random.split(key)
    x = jax.random.normal(k_x, (N, C), jnp.float32)

    # data.batch and the one-hot pooling matrix for global_add_pool
    batch = np.repeat(np.arange(B_GRAPHS), NODES)
    pool = (jnp.arange(B_GRAPHS)[:, None] == jnp.asarray(batch)[None, :]).astype(jnp.float32)

    # edge_index_local -> dense 0/1 (A + I): undirected ring inside each graph
    a01_np = np.eye(N, dtype=np.float32)
    idx = np.arange(NODES)
    for g in range(B_GRAPHS):
        o = g * NODES
        a01_np[o + idx, o + (idx + 1) % NODES] = 1.0
        a01_np[o + (idx + 1) % NODES, o + idx] = 1.0
    a_loc_01 = jnp.asarray(a01_np)
    # edge_index_global (fully connected inside each graph) is NOT materialized:
    # its normalized GCN aggregation is exactly the per-graph mean (handled via `pool`).

    params = init_params(k_p, C, dim)

    out = gcn_two_aggregators_forward(x, a_loc_01, pool, params)
    out = jax.block_until_ready(out)

    ref = _reference_forward(x, a_loc_01, pool, params)
    assert out.shape == (B_GRAPHS,)
    np.testing.assert_allclose(np.asarray(out), np.asarray(ref), rtol=2e-2, atol=2e-2)
    print("KERNEL_OK")
</pallas_src>

<mosaic_0001>
module attributes {stable_mosaic.version = 11 : i64} {
  func.func @_graph_mean_kernel(%arg0: i32, %arg1: memref<2x128xf32, #tpu.memory_space<vmem>>, %arg2: memref<128x4xf32, #tpu.memory_space<vmem>>, %arg3: memref<2x1xf32, #tpu.memory_space<vmem>>, %arg4: memref<4x32xf32, #tpu.memory_space<vmem>>, %arg5: memref<1x32xf32, #tpu.memory_space<vmem>>, %arg6: memref<2x32xf32, #tpu.memory_space<vmem>>, %arg7: memref<2x4xf32, #tpu.memory_space<vmem>>) attributes {dimension_semantics = [#tpu.dimension_semantics<arbitrary>], iteration_bounds = array<i64: 1>, scalar_prefetch = 0 : i64, scratch_operands = 1 : i64, tpu.core_type = #tpu.core_type<tc>, window_params = [{transform_indices = @transform_0, window_bounds = array<i64: 2, 128>}, {transform_indices = @transform_1, window_bounds = array<i64: 128, 4>}, {pipeline_mode = #tpu.pipeline_mode<synchronous>, transform_indices = @transform_2, window_bounds = array<i64: 2, 1>}, {pipeline_mode = #tpu.pipeline_mode<synchronous>, transform_indices = @transform_3, window_bounds = array<i64: 4, 32>}, {pipeline_mode = #tpu.pipeline_mode<synchronous>, transform_indices = @transform_4, window_bounds = array<i64: 1, 32>}, {pipeline_mode = #tpu.pipeline_mode<synchronous>, transform_indices = @transform_5, window_bounds = array<i64: 2, 32>}]} {
    %c0_i32 = arith.constant 0 : i32
    %0 = arith.cmpi eq, %arg0, %c0_i32 : i32
    %1 = arith.extui %0 : i1 to i32
    %c0_i32_0 = arith.constant 0 : i32
    %2 = arith.cmpi ne, %1, %c0_i32_0 : i32
    scf.if %2 {
      %cst_10 = arith.constant 0.000000e+00 : f32
      %12 = vector.broadcast %cst_10 : f32 to vector<2x4xf32>
      %c0_11 = arith.constant 0 : index
      %c0_12 = arith.constant 0 : index
      %13 = vector.load %arg7[%c0_11, %c0_12] : memref<2x4xf32, #tpu.memory_space<vmem>>, vector<2x4xf32>
      tpu.vector_store %arg7[%c0_11, %c0_12], %12 {strides = array<i32>} : memref<2x4xf32, #tpu.memory_space<vmem>>, vector<2x4xf32>,
    } else {
    }
    %c0 = arith.constant 0 : index
    %c0_1 = arith.constant 0 : index
    %3 = vector.load %arg7[%c0, %c0_1] : memref<2x4xf32, #tpu.memory_space<vmem>>, vector<2x4xf32>
    %c0_2 = arith.constant 0 : index
    %c0_3 = arith.constant 0 : index
    %4 = vector.load %arg1[%c0_2, %c0_3] : memref<2x128xf32, #tpu.memory_space<vmem>>, vector<2x128xf32>
    %c0_4 = arith.constant 0 : index
    %c0_5 = arith.constant 0 : index
    %5 = vector.load %arg2[%c0_4, %c0_5] : memref<128x4xf32, #tpu.memory_space<vmem>>, vector<128x4xf32>
    %cst = arith.constant dense<0.000000e+00> : vector<2x4xf32>
    %6 = tpu.matmul %4, %5, %cst {dimension_numbers = #tpu.dot_dimension_numbers<[1], [0], [0], [1], [0, 0, 1, 1], [], []>} : vector<2x128xf32>, vector<128x4xf32>, vector<2x4xf32> -> vector<2x4xf32>
    %7 = arith.addf %3, %6 : vector<2x4xf32>
    %c0_6 = arith.constant 0 : index
    %c0_7 = arith.constant 0 : index
    %8 = vector.load %arg7[%c0_6, %c0_7] : memref<2x4xf32, #tpu.memory_space<vmem>>, vector<2x4xf32>
    tpu.vector_store %arg7[%c0_6, %c0_7], %7 {strides = array<i32>} : memref<2x4xf32, #tpu.memory_space<vmem>>, vector<2x4xf32>,
    %c0_i32_8 = arith.constant 0 : i32
    %9 = arith.cmpi eq, %arg0, %c0_i32_8 : i32
    %10 = arith.extui %9 : i1 to i32
    %c0_i32_9 = arith.constant 0 : i32
    %11 = arith.cmpi ne, %10, %c0_i32_9 : i32
    scf.if %11 {
      %c0_10 = arith.constant 0 : index
      %c0_11 = arith.constant 0 : index
      %12 = vector.load %arg7[%c0_10, %c0_11] : memref<2x4xf32, #tpu.memory_space<vmem>>, vector<2x4xf32>
      %c0_12 = arith.constant 0 : index
      %c0_13 = arith.constant 0 : index
      %13 = vector.load %arg3[%c0_12, %c0_13] : memref<2x1xf32, #tpu.memory_space<vmem>>, vector<2x1xf32>
      %14 = vector.broadcast %13 : vector<2x1xf32> to vector<2x4xf32>
      %15 = arith.mulf %12, %14 : vector<2x4xf32>
      %c0_14 = arith.constant 0 : index
      %c0_15 = arith.constant 0 : index
      %16 = vector.load %arg4[%c0_14, %c0_15] : memref<4x32xf32, #tpu.memory_space<vmem>>, vector<4x32xf32>
      %cst_16 = arith.constant dense<0.000000e+00> : vector<2x32xf32>
      %17 = tpu.matmul %15, %16, %cst_16 {dimension_numbers = #tpu.dot_dimension_numbers<[1], [0], [0], [1], [0, 0, 1, 1], [], []>} : vector<2x4xf32>, vector<4x32xf32>, vector<2x32xf32> -> vector<2x32xf32>
      %c0_17 = arith.constant 0 : index
      %c0_18 = arith.constant 0 : index
      %18 = vector.load %arg5[%c0_17, %c0_18] : memref<1x32xf32, #tpu.memory_space<vmem>>, vector<1x32xf32>
      %19 = vector.broadcast %18 : vector<1x32xf32> to vector<2x32xf32>
      %20 = arith.addf %17, %19 : vector<2x32xf32>
      %cst_19 = arith.constant 0.000000e+00 : f32
      %21 = vector.broadcast %cst_19 : f32 to vector<2x32xf32>
      %22 = arith.maximumf %20, %21 : vector<2x32xf32>
      %c0_20 = arith.constant 0 : index
      %c0_21 = arith.constant 0 : index
      %23 = vector.load %arg6[%c0_20, %c0_21] : memref<2x32xf32, #tpu.memory_space<vmem>>, vector<2x32xf32>
      tpu.vector_store %arg6[%c0_20, %c0_21], %22 {strides = array<i32>} : memref<2x32xf32, #tpu.memory_space<vmem>>, vector<2x32xf32>,
    } else {
    }
    return
  }
  func.func @transform_0(%arg0: i32) -> (i32, i32) {
    %c0_i32 = arith.constant 0 : i32
    %c0_i32_0 = arith.constant 0 : i32
    return %c0_i32, %arg0 : i32, i32
  }
  func.func @transform_1(%arg0: i32) -> (i32, i32) {
    %c0_i32 = arith.constant 0 : i32
    %c0_i32_0 = arith.constant 0 : i32
    return %arg0, %c0_i32 : i32, i32
  }
  func.func @transform_2(%arg0: i32) -> (i32, i32) {
    %c0_i32 = arith.constant 0 : i32
    %c0_i32_0 = arith.constant 0 : i32
    %c0_i32_1 = arith.constant 0 : i32
    return %c0_i32, %c0_i32_0 : i32, i32
  }
  func.func @transform_3(%arg0: i32) -> (i32, i32) {
    %c0_i32 = arith.constant 0 : i32
    %c0_i32_0 = arith.constant 0 : i32
    %c0_i32_1 = arith.constant 0 : i32
    return %c0_i32, %c0_i32_0 : i32, i32
  }
  func.func @transform_4(%arg0: i32) -> (i32, i32) {
    %c0_i32 = arith.constant 0 : i32
    %c0_i32_0 = arith.constant 0 : i32
    %c0_i32_1 = arith.constant 0 : i32
    return %c0_i32, %c0_i32_0 : i32, i32
  }
  func.func @transform_5(%arg0: i32) -> (i32, i32) {
    %c0_i32 = arith.constant 0 : i32
    %c0_i32_0 = arith.constant 0 : i32
    %c0_i32_1 = arith.constant 0 : i32
    return %c0_i32, %c0_i32_0 : i32, i32
  }
}

</mosaic_0001>

<llo_original>
// kernel: tpu_custom_call.1
$region0: #{tpu_custom_call.1}
  #allocation0 [shape = 'u32[]', space=smem, size = 0x4, offset = 0x4, fixed_abs, tag = 'smem constant byte address 0x4 - core index']
  #allocation1 [shape = 'u32[144,128]{1,0:T(1,128)}', space=vmem, size = 0x12000, scoped, tag = 'internal scratch']
  #allocation2 [shape = 'f32[2,4]{1,0:T(2,128)}', space=vmem, size = 0x400, scoped, tag = 'scratch operand']
  %s0 = inlined_call_operand.vmem [shape: f32[2,128], index: 0, kind: input, shape index: {}]
  %s1 = inlined_call_operand.vmem [shape: f32[128,4], index: 1, kind: input, shape index: {}]
  %s2 = inlined_call_operand.vmem [shape: f32[2,1], index: 2, kind: input, shape index: {}]
  %s3 = inlined_call_operand.vmem [shape: f32[4,32], index: 3, kind: input, shape index: {}]
  %s4 = inlined_call_operand.vmem [shape: f32[1,32], index: 4, kind: input, shape index: {}]
  %s5 = inlined_call_operand.hbm [shape: f32[2,32], index: 5, kind: output, shape index: {}]
  %s6 = sld [smem:[#allocation0]]
  $region38: #{tpu_custom_call.1} parent=0
    _
  %s8 = ssub.s32 1, %s6
  %s9 = scalar_select 0, %s8, %s6
  $region1: #{tpu_custom_call.1} parent=0
    #allocation3 [shape = 'u8[1024]{0}', space=vmem, size = 0x400, scoped, tag = 'output window, operand 0, single buffered']
    #allocation4 [shape = 's32[1]{0}', space=sflag, size = 0x4, scoped, tag = 'scoped memory for tpu_custom_call.1']
    %10 = vsyncpa [#allocation4], 0
    // Predicated region
    $region2: #{tpu_custom_call.1} parent=1 // pred_check
      _
    $region3: #{tpu_custom_call.1} parent=1 // pred_check_branch
      %12 = sbr.rel (0) target = $region5
    $region4: #{tpu_custom_call.1} parent=1 // pred_region
      _
    $region5: #{tpu_custom_call.1} parent=1 // pred_fallthru
      _
    // Predicated region
    $region6: #{tpu_custom_call.1} parent=1 // pred_check
      _
    $region7: #{tpu_custom_call.1} parent=1 // pred_check_branch
      %14 = sbr.rel (0) target = $region9
    $region8: #{tpu_custom_call.1} parent=1 // pred_region
      _
    $region9: #{tpu_custom_call.1} parent=1 // pred_fallthru
      _
    // Predicated region
    $region10: #{tpu_custom_call.1} parent=1 // pred_check
      _
    $region11: #{tpu_custom_call.1} parent=1 // pred_check_branch
      %16 = sbr.rel (0) target = $region13
    $region12: #{tpu_custom_call.1} parent=1 // pred_region
      _
    $region13: #{tpu_custom_call.1} parent=1 // pred_fallthru
      _
    // Predicated region
    $region14: #{tpu_custom_call.1} parent=1 // pred_check
      _
    $region15: #{tpu_custom_call.1} parent=1 // pred_check_branch
      %18 = sbr.rel (0) target = $region17
    $region16: #{tpu_custom_call.1} parent=1 // pred_region
      _
    $region17: #{tpu_custom_call.1} parent=1 // pred_fallthru
      _
    // Predicated region
    $region18: #{tpu_custom_call.1} parent=1 // pred_check
      _
    $region19: #{tpu_custom_call.1} parent=1 // pred_check_branch
      %20 = sbr.rel (0) target = $region21
    $region20: #{tpu_custom_call.1} parent=1 // pred_region
      _
    $region21: #{tpu_custom_call.1} parent=1 // pred_fallthru
      _
    %p21 = scmp.eq.s32.totalorder 0, 0
    // Predicated region
    $region22: #{tpu_custom_call.1} parent=1 // pred_check
      %p22 = pneg %p21
    $region23: #{tpu_custom_call.1} parent=1 // pred_check_branch
      %24 = sbr.rel (%p22) target = $region25
    $region24: #{tpu_custom_call.1} parent=1 // pred_region
      %vm25 = vcmask 25600
      %26 = vst.msk [vmem:[#allocation2] sm:$0x3] %vm25, 0.0
    $region25: #{tpu_custom_call.1} parent=1 // pred_fallthru
      _
    %v27 = vld [vmem:[#allocation2] sm:$0x3]
    %v28 = vld [vmem:[%s0] sm:$0x3]
    %v29 = vld [vmem:[%s1] sm:$0xff]
    %v30 = vld [vmem:[%s1 + $0x8] sm:$0xff]
    %v31 = vld [vmem:[%s1 + $0x10] sm:$0xff]
    %v32 = vld [vmem:[%s1 + $0x18] sm:$0xff]
    %v33 = vld [vmem:[%s1 + $0x20] sm:$0xff]
    %v34 = vld [vmem:[%s1 + $0x28] sm:$0xff]
    %v35 = vld [vmem:[%s1 + $0x30] sm:$0xff]
    %v36 = vld [vmem:[%s1 + $0x38] sm:$0xff]
    %v37 = vld [vmem:[%s1 + $0x40] sm:$0xff]
    %v38 = vld [vmem:[%s1 + $0x48] sm:$0xff]
    %v39 = vld [vmem:[%s1 + $0x50] sm:$0xff]
    %v40 = vld [vmem:[%s1 + $0x58] sm:$0xff]
    %v41 = vld [vmem:[%s1 + $0x60] sm:$0xff]
    %v42 = vld [vmem:[%s1 + $0x68] sm:$0xff]
    %v43 = vld [vmem:[%s1 + $0x70] sm:$0xff]
    %v44 = vld [vmem:[%s1 + $0x78] sm:$0xff]
    %45 = vmatprep.subr.mxu0 0.0
    %46 = vmatpush1.msra.mxu0 %v29
    %47 = vmatprep.subr.mxu0 0.0
    %48 = vmatpush1.msra.mxu0 %v30
    %49 = vmatprep.subr.mxu0 0.0
    %50 = vmatpush1.msra.mxu0 %v31
    %51 = vmatprep.subr.mxu0 0.0
    %52 = vmatpush1.msra.mxu0 %v32
    %53 = vmatprep.subr.mxu0 0.0
    %54 = vmatpush1.msra.mxu0 %v33
    %55 = vmatprep.subr.mxu0 0.0
    %56 = vmatpush1.msra.mxu0 %v34
    %57 = vmatprep.subr.mxu0 0.0
    %58 = vmatpush1.msra.mxu0 %v35
    %59 = vmatprep.subr.mxu0 0.0
    %60 = vmatpush1.msra.mxu0 %v36
    %61 = vmatprep.subr.mxu0 0.0
    %62 = vmatpush1.msra.mxu0 %v37
    %63 = vmatprep.subr.mxu0 0.0
    %64 = vmatpush1.msra.mxu0 %v38
    %65 = vmatprep.subr.mxu0 0.0
    %66 = vmatpush1.msra.mxu0 %v39
    %67 = vmatprep.subr.mxu0 0.0
    %68 = vmatpush1.msra.mxu0 %v40
    %69 = vmatprep.subr.mxu0 0.0
    %70 = vmatpush1.msra.mxu0 %v41
    %71 = vmatprep.subr.mxu0 0.0
    %72 = vmatpush1.msra.mxu0 %v42
    %73 = vmatprep.subr.mxu0 0.0
    %74 = vmatpush1.msra.mxu0 %v43
    %75 = vmatprep.subr.mxu0 0.0
    %76 = vmatpush1.msra.mxu0 %v44
    %77 = vmatprep.subr.mxu0 0.0
    %78 = vmatpush1.msra.mxu0 0.0
    %79 = vmatprep.subr.mxu0 0.0
    %80 = vmatpush1.msra.mxu0 0.0
    %81 = vmatprep.subr.mxu0 0.0
    %82 = vmatpush1.msra.mxu0 0.0
    %83 = vmatprep.subr.mxu0 0.0
    %84 = vmatpush1.msra.mxu0 0.0
    %85 = vmatprep.subr.mxu0 0.0
    %86 = vmatpush1.msra.mxu0 0.0
    %87 = vmatprep.subr.mxu0 0.0
    %88 = vmatpush1.msra.mxu0 0.0
    %89 = vmatprep.subr.mxu0 0.0
    %90 = vmatpush1.msra.mxu0 0.0
    %91 = vmatprep.subr.mxu0 0.0
    %92 = vmatpush1.msra.mxu0 0.0
    %93 = vmatprep.subr.mxu0 0.0
    %94 = vmatpush1.msra.mxu0 0.0
    %95 = vmatprep.subr.mxu0 0.0
    %96 = vmatpush1.msra.mxu0 0.0
    %97 = vmatprep.subr.mxu0 0.0
    %98 = vmatpush1.msra.mxu0 0.0
    %99 = vmatprep.subr.mxu0 0.0
    %100 = vmatpush1.msra.mxu0 0.0
    %101 = vmatprep.subr.mxu0 0.0
    %102 = vmatpush1.msra.mxu0 0.0
    %103 = vmatprep.subr.mxu0 0.0
    %104 = vmatpush1.msra.mxu0 0.0
    %105 = vmatprep.subr.mxu0 0.0
    %106 = vmatpush1.msra.mxu0 0.0
    %107 = vmatprep.subr.mxu0 0.0
    %108 = vmatpush1.msra.mxu0 0.0
    %109 = vmatprep.mubr.f32.mxu0 0.0
    %110 = vmatmul.mubr.f32.gmra.mrb[0].mxu0 %v28
    %v111 = vpop.f32.mrb[0].mxu0
    %v112 = vadd.f32 0.0, %v111
    %v113 = vpop.f32.mrb[0].mxu0
    %114 = vdwg.mxu0
    %v115 = vadd.f32 %v27, %v112
    %vm116 = vcmask 25600
    %117 = vst.msk [vmem:[#allocation2] sm:$0x3] %vm116, %v115
    // Predicated region
    $region26: #{tpu_custom_call.1} parent=1 // pred_check
      %p118 = pneg %p21
    $region27: #{tpu_custom_call.1} parent=1 // pred_check_branch
      %120 = sbr.rel (%p118) target = $region29
    $region28: #{tpu_custom_call.1} parent=1 // pred_region
      %v121 = vld [vmem:[#allocation2] sm:$0x3]
      %v122 = vld [vmem:[%s2] sm:$0x3]
      %124 = vset.pattern.permute.xlu0 0
      %125 = vperm.xlu0 %124, %v122
      %v126 = vpop.permute.xlu0 %125
      %v128 = vmul.f32 %v121, %v126
      %v129 = vld [vmem:[%s3] sm:$0xf]
      %v130 = vld [vmem:[%s4] sm:$0x1]
      %v132 = vlaneseq
      %v133 = vshrl.u32 %v132, 7
      %v134 = vsub.s32 0, %v133
      %v135 = vrot.slane %v130, %v134
      %vm137 = vcmask 31744
      %v139 = vsel %vm137, %v128, 0
      %vm141 = vcmask 1043456
      %v143 = vsel %vm141, %v129, 0
      %145 = vmatprep.subr.mxu0 0.0
      %146 = vmatpush1.msra.mxu0 %v143
      %147 = vmatprep.subr.mxu0 0.0
      %148 = vmatpush1.msra.mxu0 0.0
      %149 = vmatprep.subr.mxu0 0.0
      %150 = vmatpush1.msra.mxu0 0.0
      %151 = vmatprep.subr.mxu0 0.0
      %152 = vmatpush1.msra.mxu0 0.0
      %153 = vmatprep.subr.mxu0 0.0
      %154 = vmatpush1.msra.mxu0 0.0
      %155 = vmatprep.subr.mxu0 0.0
      %156 = vmatpush1.msra.mxu0 0.0
      %157 = vmatprep.subr.mxu0 0.0
      %158 = vmatpush1.msra.mxu0 0.0
      %159 = vmatprep.subr.mxu0 0.0
      %160 = vmatpush1.msra.mxu0 0.0
      %161 = vmatprep.subr.mxu0 0.0
      %162 = vmatpush1.msra.mxu0 0.0
      %163 = vmatprep.subr.mxu0 0.0
      %164 = vmatpush1.msra.mxu0 0.0
      %165 = vmatprep.subr.mxu0 0.0
      %166 = vmatpush1.msra.mxu0 0.0
      %167 = vmatprep.subr.mxu0 0.0
      %168 = vmatpush1.msra.mxu0 0.0
      %169 = vmatprep.subr.mxu0 0.0
      %170 = vmatpush1.msra.mxu0 0.0
      %171 = vmatprep.subr.mxu0 0.0
      %172 = vmatpush1.msra.mxu0 0.0
      %173 = vmatprep.subr.mxu0 0.0
      %174 = vmatpush1.msra.mxu0 0.0
      %175 = vmatprep.subr.mxu0 0.0
      %176 = vmatpush1.msra.mxu0 0.0
      %177 = vmatprep.subr.mxu0 0.0
      %178 = vmatpush1.msra.mxu0 0.0
      %179 = vmatprep.subr.mxu0 0.0
      %180 = vmatpush1.msra.mxu0 0.0
      %181 = vmatprep.subr.mxu0 0.0
      %182 = vmatpush1.msra.mxu0 0.0
      %183 = vmatprep.subr.mxu0 0.0
      %184 = vmatpush1.msra.mxu0 0.0
      %185 = vmatprep.subr.mxu0 0.0
      %186 = vmatpush1.msra.mxu0 0.0
      %187 = vmatprep.subr.mxu0 0.0
      %188 = vmatpush1.msra.mxu0 0.0
      %189 = vmatprep.subr.mxu0 0.0
      %190 = vmatpush1.msra.mxu0 0.0
      %191 = vmatprep.subr.mxu0 0.0
      %192 = vmatpush1.msra.mxu0 0.0
      %193 = vmatprep.subr.mxu0 0.0
      %194 = vmatpush1.msra.mxu0 0.0
      %195 = vmatprep.subr.mxu0 0.0
      %196 = vmatpush1.msra.mxu0 0.0
      %197 = vmatprep.subr.mxu0 0.0
      %198 = vmatpush1.msra.mxu0 0.0
      %199 = vmatprep.subr.mxu0 0.0
      %200 = vmatpush1.msra.mxu0 0.0
      %201 = vmatprep.subr.mxu0 0.0
      %202 = vmatpush1.msra.mxu0 0.0
      %203 = vmatprep.subr.mxu0 0.0
      %204 = vmatpush1.msra.mxu0 0.0
      %205 = vmatprep.subr.mxu0 0.0
      %206 = vmatpush1.msra.mxu0 0.0
      %207 = vmatprep.subr.mxu0 0.0
      %208 = vmatpush1.msra.mxu0 0.0
      %209 = vmatprep.mubr.f32.mxu0 0.0
      %210 = vmatmul.mubr.f32.gmra.mrb[0].mxu0 %v139
      %v211 = vpop.f32.mrb[0].mxu0
      %v212 = vadd.f32 %v135, %v211
      %v213 = vpop.f32.mrb[0].mxu0
      %214 = vdwg.mxu0
      %v215 = vmax.f32 %v212, 0.0
      %vm216 = vcmask 254976
      %217 = vst.msk [vmem:[#allocation3] sm:$0x3] %vm216, %v215
    $region29: #{tpu_custom_call.1} parent=1 // pred_fallthru
      _
    // Predicated region
    $region30: #{tpu_custom_call.1} parent=1 // pred_check
      _
    $region31: #{tpu_custom_call.1} parent=1 // pred_check_branch
      %219 = sbr.rel (0) target = $region33
    $region32: #{tpu_custom_call.1} parent=1 // pred_region
      %s221 = ssub.s32 32, 32
      %222 = vsyncadd [#allocation4], %s221
      %s224 = sshll.u32 [#allocation3], 4
      %s225 = int_to_ptr.vmem [resolvable:$true] %s224
      %227 = dma.vmem_to_hbm [thread:$0]  %s225, 32, %s5, [#allocation4]
    $region33: #{tpu_custom_call.1} parent=1 // pred_fallthru
      _
    // Predicated region
    $region34: #{tpu_custom_call.1} parent=1 // pred_check
      _
    $region35: #{tpu_custom_call.1} parent=1 // pred_check_branch
      %229 = sbr.rel (0) target = $region37
    $region36: #{tpu_custom_call.1} parent=1 // pred_region
      %230 = dma.done [#allocation4], 32
    $region37: #{tpu_custom_call.1} parent=1 // pred_fallthru
      _
    %231 = vsyncpa [#allocation4], 1

</llo_original>
